<compile_context>
chip_gen: v7x
topology: tpu7x:2x2x1
jax: 0.10.0
libtpu: 0.0.40
codegen_flags: <defaults>
</compile_context>

<pallas_src>
import functools
import math

import jax
import jax.numpy as jnp
from jax.experimental import pallas as pl
from jax.experimental.pallas import tpu as pltpu

LANE = 128                 # pad feature dims to lane width
_NEG_MASK = -9.0e15        # same masking constant as the PyTorch module


def _round_up(x, m):
    return ((x + m - 1) // m) * m


# ---------------------------------------------------------------------------
# Stage 1: projection  Wh = h @ W  and fused attention scores  f = Wh @ [a1 a2]
# ---------------------------------------------------------------------------
def _proj_kernel(h_ref, w_ref, a_ref, wh_ref, f_ref):
    # bf16 operands, f32 accumulation on the MXU.
    wh = jnp.dot(h_ref[...], w_ref[...], preferred_element_type=jnp.float32)
    wh_ref[...] = wh.astype(wh_ref.dtype)
    # One fused (C, 2) projection instead of two tiny (C, 1) matmuls.
    f_ref[...] = jnp.dot(wh, a_ref[...], preferred_element_type=jnp.float32)


# ---------------------------------------------------------------------------
# Stage 2: masked attention + online (flash-style) softmax + aggregation.
# grid = (row_tiles, col_tiles); col axis is the reduction ("arbitrary") axis.
# ---------------------------------------------------------------------------
def _attn_kernel(f1_ref, f2_ref, adj_ref, wh_ref, out_ref,
                 m_sc, l_sc, acc_sc, *, leakyrelu_alpha, relu_alpha):
    ki = pl.program_id(1)

    @pl.when(ki == 0)
    def _():
        m_sc[...] = jnp.full_like(m_sc, -jnp.inf)
        l_sc[...] = jnp.zeros_like(l_sc)
        acc_sc[...] = jnp.zeros_like(acc_sc)

    # Attention logits for this (row_tile, col_tile) block. f2 was pre-
    # transposed to a (1, N) row outside the inner loop (no per-tile XLU xpose).
    e = f1_ref[...] + f2_ref[...]                       # (tq,1)+(1,tk) -> (tq,tk)
    e = jnp.where(e > 0, e, leakyrelu_alpha * e)        # LeakyReLU
    mask = adj_ref[...].astype(jnp.int32) > 0           # adj travels as int8
    e = jnp.where(mask, e, _NEG_MASK)                   # f32: safe, no overflow

    # Online softmax update (keep stats in f32).
    m_prev = m_sc[...]
    m_new = jnp.maximum(m_prev, jnp.max(e, axis=1, keepdims=True))
    alpha = jnp.exp(m_prev - m_new)
    p = jnp.exp(e - m_new)
    l_sc[...] = alpha * l_sc[...] + jnp.sum(p, axis=1, keepdims=True)
    acc_sc[...] = alpha * acc_sc[...] + jnp.dot(
        p.astype(wh_ref.dtype), wh_ref[...], preferred_element_type=jnp.float32)
    m_sc[...] = m_new

    # TODO(synk): dropout(attention) is identity in eval mode; training mode
    # would draw a bernoulli mask via pltpu.prng_seed / pltpu.stateful_bernoulli.

    @pl.when(ki == pl.num_programs(1) - 1)
    def _():
        # Normalize once at finalize; approx reciprocal runs on the idle EUP.
        h_prime = acc_sc[...] * pl.reciprocal(l_sc[...], approx=True)
        out = jnp.where(h_prime > 0, h_prime, relu_alpha * h_prime)  # concat=True
        out_ref[...] = out.astype(out_ref.dtype)


def gat_layer_forward(h, adj, W, a, *, leakyrelu_alpha=0.5, relu_alpha=0.5,
                      block_n=128):
    """GAT layer forward. h:(N,Fin) adj:(N,N) W:(Fin,C) a:(2C,1) -> (N,C) f32."""
    N, Fin = h.shape
    C = W.shape[1]
    assert a.shape == (2 * C, 1)

    Np = _round_up(N, block_n)
    Fp = _round_up(Fin, LANE)
    Cp = _round_up(C, LANE)

    # bf16 matmul operands (f32 accumulate in-kernel); int8 adjacency mask.
    h_p = jnp.zeros((Np, Fp), jnp.bfloat16).at[:N, :Fin].set(h.astype(jnp.bfloat16))
    W_p = jnp.zeros((Fp, Cp), jnp.bfloat16).at[:Fin, :C].set(W.astype(jnp.bfloat16))
    a_cat = jnp.zeros((Cp, 2), jnp.float32)
    a_cat = a_cat.at[:C, 0].set(a[:C, 0]).at[:C, 1].set(a[C:, 0])
    adj_p = jnp.zeros((Np, Np), jnp.int8).at[:N, :N].set((adj > 0).astype(jnp.int8))

    n_row = Np // block_n

    # ---- Stage 1: projection ----
    wh, f = pl.pallas_call(
        _proj_kernel,
        out_shape=(jax.ShapeDtypeStruct((Np, Cp), jnp.bfloat16),
                   jax.ShapeDtypeStruct((Np, 2), jnp.float32)),
        grid=(n_row,),
        in_specs=[pl.BlockSpec((block_n, Fp), lambda i: (i, 0)),
                  pl.BlockSpec((Fp, Cp), lambda i: (0, 0)),
                  pl.BlockSpec((Cp, 2), lambda i: (0, 0))],
        out_specs=(pl.BlockSpec((block_n, Cp), lambda i: (i, 0)),
                   pl.BlockSpec((block_n, 2), lambda i: (i, 0))),
        compiler_params=pltpu.CompilerParams(
            dimension_semantics=("parallel",)),
    )(h_p, W_p, a_cat)

    f1 = f[:, 0:1]                    # (Np, 1) row term
    f2 = f[:, 1:2].reshape(1, Np)     # (1, Np) col term (layout plumbing only)

    # ---- Stage 2: masked softmax attention + aggregation ----
    kernel = functools.partial(_attn_kernel,
                               leakyrelu_alpha=leakyrelu_alpha,
                               relu_alpha=relu_alpha)
    out_p = pl.pallas_call(
        kernel,
        out_shape=jax.ShapeDtypeStruct((Np, Cp), jnp.float32),
        grid=(n_row, n_row),
        in_specs=[pl.BlockSpec((block_n, 1), lambda qi, ki: (qi, 0)),
                  pl.BlockSpec((1, block_n), lambda qi, ki: (0, ki)),
                  pl.BlockSpec((block_n, block_n), lambda qi, ki: (qi, ki)),
                  pl.BlockSpec((block_n, Cp), lambda qi, ki: (ki, 0))],
        out_specs=pl.BlockSpec((block_n, Cp), lambda qi, ki: (qi, 0)),
        scratch_shapes=[pltpu.VMEM((block_n, 1), jnp.float32),   # running max
                        pltpu.VMEM((block_n, 1), jnp.float32),   # running sum
                        pltpu.VMEM((block_n, Cp), jnp.float32)], # accumulator
        compiler_params=pltpu.CompilerParams(
            dimension_semantics=("parallel", "arbitrary")),
    )(f1, f2, adj_p, wh)

    return out_p[:N, :C]


def _xavier_uniform(key, shape):
    fan_in, fan_out = shape[0], shape[1]
    limit = math.sqrt(6.0 / (fan_in + fan_out))
    return jax.random.uniform(key, shape, jnp.float32, -limit, limit)


def _reference(h, adj, W, a, C, leakyrelu_alpha=0.5, relu_alpha=0.5):
    Wh = h @ W
    e = Wh @ a[:C] + (Wh @ a[C:]).T
    e = jnp.where(e > 0, e, leakyrelu_alpha * e)
    att = jnp.where(adj > 0, e, _NEG_MASK)
    att = jax.nn.softmax(att, axis=1)
    hp = att @ Wh
    return jnp.where(hp > 0, hp, relu_alpha * hp)


if __name__ == "__main__":
    # Small shapes consistent with the module: N nodes, in_channels -> out_channels
    N, IN_CH, OUT_CH = 16, 32, 16

    key = jax.random.PRNGKey(0)
    k_h, k_adj, k_W, k_a = jax.random.split(key, 4)

    # Node features (ptensors0 -> plain (N, in_channels) matrix)
    h = jax.random.normal(k_h, (N, IN_CH), jnp.float32)

    # Dense adjacency with self loops (values > 0 mark edges)
    adj = (jax.random.uniform(k_adj, (N, N)) < 0.3).astype(jnp.float32)
    adj = jnp.maximum(adj, jnp.eye(N, dtype=jnp.float32))

    # Deterministic xavier-uniform parameters
    W = _xavier_uniform(k_W, (IN_CH, OUT_CH))
    a = _xavier_uniform(k_a, (2 * OUT_CH, 1))

    out = gat_layer_forward(h, adj, W, a, leakyrelu_alpha=0.5, relu_alpha=0.5)
    jax.block_until_ready(out)

    # Tight check vs a reference using the same operand precision (bf16 weights
    # and features, f32 math) — isolates kernel logic from deliberate bf16 cast.
    h_q = h.astype(jnp.bfloat16).astype(jnp.float32)
    W_q = W.astype(jnp.bfloat16).astype(jnp.float32)
    ref_q = _reference(h_q, adj, W_q, a, OUT_CH)
    assert jnp.allclose(out, ref_q, atol=2e-2, rtol=2e-2), "mismatch vs bf16-operand ref"

    # Looser sanity check vs the pure-f32 PyTorch-equivalent reference.
    ref_f32 = _reference(h, adj, W, a, OUT_CH)
    assert jnp.allclose(out, ref_f32, atol=1.5e-1, rtol=1.5e-1), "mismatch vs f32 ref"

    print("KERNEL_OK")
</pallas_src>

<mosaic_0001>
module attributes {stable_mosaic.version = 11 : i64} {
  func.func @_proj_kernel(%arg0: i32, %arg1: memref<128x128xbf16, #tpu.memory_space<vmem>>, %arg2: memref<128x128xbf16, #tpu.memory_space<vmem>>, %arg3: memref<128x2xf32, #tpu.memory_space<vmem>>, %arg4: memref<128x128xbf16, #tpu.memory_space<vmem>>, %arg5: memref<128x2xf32, #tpu.memory_space<vmem>>) attributes {dimension_semantics = [#tpu.dimension_semantics<parallel>], iteration_bounds = array<i64: 1>, scalar_prefetch = 0 : i64, scratch_operands = 0 : i64, tpu.core_type = #tpu.core_type<tc>, window_params = [{transform_indices = @transform_0, window_bounds = array<i64: 128, 128>}, {pipeline_mode = #tpu.pipeline_mode<synchronous>, transform_indices = @transform_1, window_bounds = array<i64: 128, 128>}, {pipeline_mode = #tpu.pipeline_mode<synchronous>, transform_indices = @transform_2, window_bounds = array<i64: 128, 2>}, {transform_indices = @transform_3, window_bounds = array<i64: 128, 128>}, {transform_indices = @transform_4, window_bounds = array<i64: 128, 2>}]} {
    %c0 = arith.constant 0 : index
    %c0_0 = arith.constant 0 : index
    %0 = vector.load %arg1[%c0, %c0_0] : memref<128x128xbf16, #tpu.memory_space<vmem>>, vector<128x128xbf16>
    %c0_1 = arith.constant 0 : index
    %c0_2 = arith.constant 0 : index
    %1 = vector.load %arg2[%c0_1, %c0_2] : memref<128x128xbf16, #tpu.memory_space<vmem>>, vector<128x128xbf16>
    %cst = arith.constant dense<0.000000e+00> : vector<128x128xf32>
    %2 = tpu.matmul %0, %1, %cst {dimension_numbers = #tpu.dot_dimension_numbers<[1], [0], [0], [1], [0, 0, 1, 1], [], []>} : vector<128x128xbf16>, vector<128x128xbf16>, vector<128x128xf32> -> vector<128x128xf32>
    %3 = arith.truncf %2 : vector<128x128xf32> to vector<128x128xbf16>
    %c0_3 = arith.constant 0 : index
    %c0_4 = arith.constant 0 : index
    %4 = vector.load %arg4[%c0_3, %c0_4] : memref<128x128xbf16, #tpu.memory_space<vmem>>, vector<128x128xbf16>
    tpu.vector_store %arg4[%c0_3, %c0_4], %3 {strides = array<i32>} : memref<128x128xbf16, #tpu.memory_space<vmem>>, vector<128x128xbf16>,
    %c0_5 = arith.constant 0 : index
    %c0_6 = arith.constant 0 : index
    %5 = vector.load %arg3[%c0_5, %c0_6] : memref<128x2xf32, #tpu.memory_space<vmem>>, vector<128x2xf32>
    %cst_7 = arith.constant dense<0.000000e+00> : vector<128x2xf32>
    %6 = tpu.matmul %2, %5, %cst_7 {dimension_numbers = #tpu.dot_dimension_numbers<[1], [0], [0], [1], [0, 0, 1, 1], [], []>} : vector<128x128xf32>, vector<128x2xf32>, vector<128x2xf32> -> vector<128x2xf32>
    %c0_8 = arith.constant 0 : index
    %c0_9 = arith.constant 0 : index
    %7 = vector.load %arg5[%c0_8, %c0_9] : memref<128x2xf32, #tpu.memory_space<vmem>>, vector<128x2xf32>
    tpu.vector_store %arg5[%c0_8, %c0_9], %6 {strides = array<i32>} : memref<128x2xf32, #tpu.memory_space<vmem>>, vector<128x2xf32>,
    return
  }
  func.func @transform_0(%arg0: i32) -> (i32, i32) {
    %c0_i32 = arith.constant 0 : i32
    %c0_i32_0 = arith.constant 0 : i32
    return %arg0, %c0_i32 : i32, i32
  }
  func.func @transform_1(%arg0: i32) -> (i32, i32) {
    %c0_i32 = arith.constant 0 : i32
    %c0_i32_0 = arith.constant 0 : i32
    %c0_i32_1 = arith.constant 0 : i32
    return %c0_i32, %c0_i32_0 : i32, i32
  }
  func.func @transform_2(%arg0: i32) -> (i32, i32) {
    %c0_i32 = arith.constant 0 : i32
    %c0_i32_0 = arith.constant 0 : i32
    %c0_i32_1 = arith.constant 0 : i32
    return %c0_i32, %c0_i32_0 : i32, i32
  }
  func.func @transform_3(%arg0: i32) -> (i32, i32) {
    %c0_i32 = arith.constant 0 : i32
    %c0_i32_0 = arith.constant 0 : i32
    return %arg0, %c0_i32 : i32, i32
  }
  func.func @transform_4(%arg0: i32) -> (i32, i32) {
    %c0_i32 = arith.constant 0 : i32
    %c0_i32_0 = arith.constant 0 : i32
    return %arg0, %c0_i32 : i32, i32
  }
}

</mosaic_0001>

<llo_original>
// kernel: tpu_custom_call.1
$region0: #{tpu_custom_call.1}
  #allocation0 [shape = 'u32[]', space=smem, size = 0x4, offset = 0x4, fixed_abs, tag = 'smem constant byte address 0x4 - core index']
  #allocation1 [shape = 'u32[144,128]{1,0:T(1,128)}', space=vmem, size = 0x12000, scoped, tag = 'internal scratch']
  %s0 = inlined_call_operand.vmem [shape: bf16[128,128], index: 0, kind: input, shape index: {}]
  %s1 = inlined_call_operand.vmem [shape: bf16[128,128], index: 1, kind: input, shape index: {}]
  %s2 = inlined_call_operand.vmem [shape: f32[128,2], index: 2, kind: input, shape index: {}]
  %s3 = inlined_call_operand.hbm [shape: bf16[128,128], index: 3, kind: output, shape index: {0}]
  %s4 = inlined_call_operand.vmem [shape: f32[128,2], index: 4, kind: output, shape index: {1}]
  %5 = xla_tuple %s3, %s4
  %s6 = sld [smem:[#allocation0]]
  $region30: #{tpu_custom_call.1} parent=0
    _
  %s8 = ssub.s32 1, %s6
  %s9 = scalar_select 0, %s8, %s6
  $region1: #{tpu_custom_call.1} parent=0
    #allocation2 [shape = 'u8[32768]{0}', space=vmem, size = 0x8000, scoped, tag = 'output window, operand 0, single buffered']
    #allocation3 [shape = 's32[1]{0}', space=sflag, size = 0x4, scoped, tag = 'scoped memory for tpu_custom_call.1']
    %10 = vsyncpa [#allocation3], 0
    // Predicated region
    $region2: #{tpu_custom_call.1} parent=1 // pred_check
      _
    $region3: #{tpu_custom_call.1} parent=1 // pred_check_branch
      %12 = sbr.rel (0) target = $region5
    $region4: #{tpu_custom_call.1} parent=1 // pred_region
      _
    $region5: #{tpu_custom_call.1} parent=1 // pred_fallthru
      _
    // Predicated region
    $region6: #{tpu_custom_call.1} parent=1 // pred_check
      _
    $region7: #{tpu_custom_call.1} parent=1 // pred_check_branch
      %14 = sbr.rel (0) target = $region9
    $region8: #{tpu_custom_call.1} parent=1 // pred_region
      _
    $region9: #{tpu_custom_call.1} parent=1 // pred_fallthru
      _
    // Predicated region
    $region10: #{tpu_custom_call.1} parent=1 // pred_check
      _
    $region11: #{tpu_custom_call.1} parent=1 // pred_check_branch
      %16 = sbr.rel (0) target = $region13
    $region12: #{tpu_custom_call.1} parent=1 // pred_region
      _
    $region13: #{tpu_custom_call.1} parent=1 // pred_fallthru
      _
    %v18 = vld [vmem:[%s0] sm:$0xf]
    %v19 = vld [vmem:[%s0 + $0x4] sm:$0xf]
    %v20 = vld [vmem:[%s0 + $0x8] sm:$0xf]
    %v21 = vld [vmem:[%s0 + $0xc] sm:$0xf]
    %v22 = vld [vmem:[%s0 + $0x10] sm:$0xf]
    %v23 = vld [vmem:[%s0 + $0x14] sm:$0xf]
    %v24 = vld [vmem:[%s0 + $0x18] sm:$0xf]
    %v25 = vld [vmem:[%s0 + $0x1c] sm:$0xf]
    %v26 = vld [vmem:[%s0 + $0x20] sm:$0xf]
    %v27 = vld [vmem:[%s0 + $0x24] sm:$0xf]
    %v28 = vld [vmem:[%s0 + $0x28] sm:$0xf]
    %v29 = vld [vmem:[%s0 + $0x2c] sm:$0xf]
    %v30 = vld [vmem:[%s0 + $0x30] sm:$0xf]
    %v31 = vld [vmem:[%s0 + $0x34] sm:$0xf]
    %v32 = vld [vmem:[%s0 + $0x38] sm:$0xf]
    %v33 = vld [vmem:[%s0 + $0x3c] sm:$0xf]
    %v34 = vld [vmem:[%s1] sm:$0xf]
    %v35 = vld [vmem:[%s1 + $0x4] sm:$0xf]
    %v36 = vld [vmem:[%s1 + $0x8] sm:$0xf]
    %v37 = vld [vmem:[%s1 + $0xc] sm:$0xf]
    %v38 = vld [vmem:[%s1 + $0x10] sm:$0xf]
    %v39 = vld [vmem:[%s1 + $0x14] sm:$0xf]
    %v40 = vld [vmem:[%s1 + $0x18] sm:$0xf]
    %v41 = vld [vmem:[%s1 + $0x1c] sm:$0xf]
    %v42 = vld [vmem:[%s1 + $0x20] sm:$0xf]
    %v43 = vld [vmem:[%s1 + $0x24] sm:$0xf]
    %v44 = vld [vmem:[%s1 + $0x28] sm:$0xf]
    %v45 = vld [vmem:[%s1 + $0x2c] sm:$0xf]
    %v46 = vld [vmem:[%s1 + $0x30] sm:$0xf]
    %v47 = vld [vmem:[%s1 + $0x34] sm:$0xf]
    %v48 = vld [vmem:[%s1 + $0x38] sm:$0xf]
    %v49 = vld [vmem:[%s1 + $0x3c] sm:$0xf]
    %v66 = vunpack.c.l.b16 %v18
    %v67 = vunpack.c.l.b16 %v19
    %v68 = vunpack.c.l.b16 %v20
    %v69 = vunpack.c.l.b16 %v21
    %v70 = vunpack.c.l.b16 %v22
    %v71 = vunpack.c.l.b16 %v23
    %v72 = vunpack.c.l.b16 %v24
    %v73 = vunpack.c.l.b16 %v25
    %v74 = vunpack.c.l.b16 %v26
    %v75 = vunpack.c.l.b16 %v27
    %v76 = vunpack.c.l.b16 %v28
    %v77 = vunpack.c.l.b16 %v29
    %v78 = vunpack.c.l.b16 %v30
    %v79 = vunpack.c.l.b16 %v31
    %v80 = vunpack.c.l.b16 %v32
    %v81 = vunpack.c.l.b16 %v33
    %v82 = vpack.c.b16 %v67, %v66
    %v83 = vpack.c.b16 %v69, %v68
    %v84 = vpack.c.b16 %v71, %v70
    %v85 = vpack.c.b16 %v73, %v72
    %v86 = vpack.c.b16 %v75, %v74
    %v87 = vpack.c.b16 %v77, %v76
    %v88 = vpack.c.b16 %v79, %v78
    %v89 = vpack.c.b16 %v81, %v80
    %v114 = vunpack.c.l.b16 %v34
    %v115 = vunpack.c.l.b16 %v35
    %v116 = vunpack.c.l.b16 %v36
    %v117 = vunpack.c.l.b16 %v37
    %v118 = vunpack.c.l.b16 %v38
    %v119 = vunpack.c.l.b16 %v39
    %v120 = vunpack.c.l.b16 %v40
    %v121 = vunpack.c.l.b16 %v41
    %v122 = vunpack.c.l.b16 %v42
    %v123 = vunpack.c.l.b16 %v43
    %v124 = vunpack.c.l.b16 %v44
    %v125 = vunpack.c.l.b16 %v45
    %v126 = vunpack.c.l.b16 %v46
    %v127 = vunpack.c.l.b16 %v47
    %v128 = vunpack.c.l.b16 %v48
    %v129 = vunpack.c.l.b16 %v49
    %v130 = vpack.c.b16 %v115, %v114
    %v131 = vpack.c.b16 %v117, %v116
    %v132 = vpack.c.b16 %v119, %v118
    %v133 = vpack.c.b16 %v121, %v120
    %v134 = vpack.c.b16 %v123, %v122
    %v135 = vpack.c.b16 %v125, %v124
    %v136 = vpack.c.b16 %v127, %v126
    %v137 = vpack.c.b16 %v129, %v128
    %146 = vmatprep.subr.bf16.mxu0 0
    %147 = vmatpush1.bf16.msra.mxu0 %v130
    %148 = vmatprep.subr.bf16.mxu0 0
    %149 = vmatpush1.bf16.msra.mxu0 %v131
    %150 = vmatprep.subr.bf16.mxu0 0
    %151 = vmatpush1.bf16.msra.mxu0 %v132
    %152 = vmatprep.subr.bf16.mxu0 0
    %153 = vmatpush1.bf16.msra.mxu0 %v133
    %154 = vmatprep.subr.bf16.mxu0 0
    %155 = vmatpush1.bf16.msra.mxu0 %v134
    %156 = vmatprep.subr.bf16.mxu0 0
    %157 = vmatpush1.bf16.msra.mxu0 %v135
    %158 = vmatprep.subr.bf16.mxu0 0
    %159 = vmatpush1.bf16.msra.mxu0 %v136
    %160 = vmatprep.subr.bf16.mxu0 0
    %161 = vmatpush1.bf16.msra.mxu0 %v137
    %162 = vmatprep.subr.bf16.mxu0 0
    %163 = vmatpush1.bf16.msra.mxu0 0
    %164 = vmatprep.subr.bf16.mxu0 0
    %165 = vmatpush1.bf16.msra.mxu0 0
    %166 = vmatprep.subr.bf16.mxu0 0
    %167 = vmatpush1.bf16.msra.mxu0 0
    %168 = vmatprep.subr.bf16.mxu0 0
    %169 = vmatpush1.bf16.msra.mxu0 0
    %170 = vmatprep.subr.bf16.mxu0 0
    %171 = vmatpush1.bf16.msra.mxu0 0
    %172 = vmatprep.subr.bf16.mxu0 0
    %173 = vmatpush1.bf16.msra.mxu0 0
    %174 = vmatprep.subr.bf16.mxu0 0
    %175 = vmatpush1.bf16.msra.mxu0 0
    %176 = vmatprep.subr.bf16.mxu0 0
    %177 = vmatpush1.bf16.msra.mxu0 0
    %178 = vmatprep.mubr.bf16.mxu0 0
    %179 = vmatmul.mubr.bf16.gmra.mrb[0].mxu0 %v82
    %v180 = vpop.f32.mrb[0].mxu0
    %v181 = vadd.f32 0.0, %v180
    %v182 = vpop.f32.mrb[0].mxu0
    %v183 = vpop.f32.mrb[0].mxu0
    %v184 = vadd.f32 0.0, %v183
    %v185 = vpop.f32.mrb[0].mxu0
    %186 = vmatprep.mubr.bf16.mxu0 0
    %187 = vmatmul.mubr.bf16.gmra.mrb[0].mxu0 %v83
    %v188 = vpop.f32.mrb[0].mxu0
    %v189 = vadd.f32 0.0, %v188
    %v190 = vpop.f32.mrb[0].mxu0
    %v191 = vpop.f32.mrb[0].mxu0
    %v192 = vadd.f32 0.0, %v191
    %v193 = vpop.f32.mrb[0].mxu0
    %194 = vmatprep.mubr.bf16.mxu0 0
    %195 = vmatmul.mubr.bf16.gmra.mrb[0].mxu0 %v84
    %v196 = vpop.f32.mrb[0].mxu0
    %v197 = vadd.f32 0.0, %v196
    %v198 = vpop.f32.mrb[0].mxu0
    %v199 = vpop.f32.mrb[0].mxu0
    %v200 = vadd.f32 0.0, %v199
    %v201 = vpop.f32.mrb[0].mxu0
    %202 = vmatprep.mubr.bf16.mxu0 0
    %203 = vmatmul.mubr.bf16.gmra.mrb[0].mxu0 %v85
    %v204 = vpop.f32.mrb[0].mxu0
    %v205 = vadd.f32 0.0, %v204
    %v206 = vpop.f32.mrb[0].mxu0
    %v207 = vpop.f32.mrb[0].mxu0
    %v208 = vadd.f32 0.0, %v207
    %v209 = vpop.f32.mrb[0].mxu0
    %210 = vmatprep.mubr.bf16.mxu0 0
    %211 = vmatmul.mubr.bf16.gmra.mrb[0].mxu0 %v86
    %v212 = vpop.f32.mrb[0].mxu0
    %v213 = vadd.f32 0.0, %v212
    %v214 = vpop.f32.mrb[0].mxu0
    %v215 = vpop.f32.mrb[0].mxu0
    %v216 = vadd.f32 0.0, %v215
    %v217 = vpop.f32.mrb[0].mxu0
    %218 = vmatprep.mubr.bf16.mxu0 0
    %219 = vmatmul.mubr.bf16.gmra.mrb[0].mxu0 %v87
    %v220 = vpop.f32.mrb[0].mxu0
    %v221 = vadd.f32 0.0, %v220
    %v222 = vpop.f32.mrb[0].mxu0
    %v223 = vpop.f32.mrb[0].mxu0
    %v224 = vadd.f32 0.0, %v223
    %v225 = vpop.f32.mrb[0].mxu0
    %226 = vmatprep.mubr.bf16.mxu0 0
    %227 = vmatmul.mubr.bf16.gmra.mrb[0].mxu0 %v88
    %v228 = vpop.f32.mrb[0].mxu0
    %v229 = vadd.f32 0.0, %v228
    %v230 = vpop.f32.mrb[0].mxu0
    %v231 = vpop.f32.mrb[0].mxu0
    %v232 = vadd.f32 0.0, %v231
    %v233 = vpop.f32.mrb[0].mxu0
    %234 = vmatprep.mubr.bf16.mxu0 0
    %235 = vmatmul.mubr.bf16.gmra.mrb[0].mxu0 %v89
    %v236 = vpop.f32.mrb[0].mxu0
    %v237 = vadd.f32 0.0, %v236
    %v238 = vpop.f32.mrb[0].mxu0
    %v239 = vpop.f32.mrb[0].mxu0
    %v240 = vadd.f32 0.0, %v239
    %v241 = vpop.f32.mrb[0].mxu0
    %242 = vdwg.mxu0
    %v243 = vpack.c.bf16 %v184, %v181
    %v244 = vpack.c.bf16 %v192, %v189
    %v245 = vpack.c.bf16 %v200, %v197
    %v246 = vpack.c.bf16 %v208, %v205
    %v247 = vpack.c.bf16 %v216, %v213
    %v248 = vpack.c.bf16 %v224, %v221
    %v249 = vpack.c.bf16 %v232, %v229
    %v250 = vpack.c.bf16 %v240, %v237
    %v259 = vunpack.c.l.b16 %v243
    %v260 = vunpack.c.h.b16 %v243
    %v261 = vunpack.c.l.b16 %v244
    %v262 = vunpack.c.h.b16 %v244
    %v263 = vunpack.c.l.b16 %v245
    %v264 = vunpack.c.h.b16 %v245
    %v265 = vunpack.c.l.b16 %v246
    %v266 = vunpack.c.h.b16 %v246
    %v267 = vunpack.c.l.b16 %v247
    %v268 = vunpack.c.h.b16 %v247
    %v269 = vunpack.c.l.b16 %v248
    %v270 = vunpack.c.h.b16 %v248
    %v271 = vunpack.c.l.b16 %v249
    %v272 = vunpack.c.h.b16 %v249
    %v273 = vunpack.c.l.b16 %v250
    %v274 = vunpack.c.h.b16 %v250
    %v275 = vpack.c.b16 %v259, %v259
    %v276 = vpack.c.b16 %v260, %v260
    %v277 = vpack.c.b16 %v261, %v261
    %v278 = vpack.c.b16 %v262, %v262
    %v279 = vpack.c.b16 %v263, %v263
    %v280 = vpack.c.b16 %v264, %v264
    %v281 = vpack.c.b16 %v265, %v265
    %v282 = vpack.c.b16 %v266, %v266
    %v283 = vpack.c.b16 %v267, %v267
    %v284 = vpack.c.b16 %v268, %v268
    %v285 = vpack.c.b16 %v269, %v269
    %v286 = vpack.c.b16 %v270, %v270
    %v287 = vpack.c.b16 %v271, %v271
    %v288 = vpack.c.b16 %v272, %v272
    %v289 = vpack.c.b16 %v273, %v273
    %v290 = vpack.c.b16 %v274, %v274
    %307 = vst [vmem:[#allocation2] sm:$0xf] %v275
    %308 = vst [vmem:[#allocation2 + $0x4] sm:$0xf] %v276
    %309 = vst [vmem:[#allocation2 + $0x8] sm:$0xf] %v277
    %310 = vst [vmem:[#allocation2 + $0xc] sm:$0xf] %v278
    %311 = vst [vmem:[#allocation2 + $0x10] sm:$0xf] %v279
    %312 = vst [vmem:[#allocation2 + $0x14] sm:$0xf] %v280
    %313 = vst [vmem:[#allocation2 + $0x18] sm:$0xf] %v281
    %314 = vst [vmem:[#allocation2 + $0x1c] sm:$0xf] %v282
    %315 = vst [vmem:[#allocation2 + $0x20] sm:$0xf] %v283
    %316 = vst [vmem:[#allocation2 + $0x24] sm:$0xf] %v284
    %317 = vst [vmem:[#allocation2 + $0x28] sm:$0xf] %v285
    %318 = vst [vmem:[#allocation2 + $0x2c] sm:$0xf] %v286
    %319 = vst [vmem:[#allocation2 + $0x30] sm:$0xf] %v287
    %320 = vst [vmem:[#allocation2 + $0x34] sm:$0xf] %v288
    %321 = vst [vmem:[#allocation2 + $0x38] sm:$0xf] %v289
    %322 = vst [vmem:[#allocation2 + $0x3c] sm:$0xf] %v290
    %v323 = vld [vmem:[%s2] sm:$0xff]
    %v324 = vld [vmem:[%s2 + $0x8] sm:$0xff]
    %v325 = vld [vmem:[%s2 + $0x10] sm:$0xff]
    %v326 = vld [vmem:[%s2 + $0x18] sm:$0xff]
    %v327 = vld [vmem:[%s2 + $0x20] sm:$0xff]
    %v328 = vld [vmem:[%s2 + $0x28] sm:$0xff]
    %v329 = vld [vmem:[%s2 + $0x30] sm:$0xff]
    %v330 = vld [vmem:[%s2 + $0x38] sm:$0xff]
    %v331 = vld [vmem:[%s2 + $0x40] sm:$0xff]
    %v332 = vld [vmem:[%s2 + $0x48] sm:$0xff]
    %v333 = vld [vmem:[%s2 + $0x50] sm:$0xff]
    %v334 = vld [vmem:[%s2 + $0x58] sm:$0xff]
    %v335 = vld [vmem:[%s2 + $0x60] sm:$0xff]
    %v336 = vld [vmem:[%s2 + $0x68] sm:$0xff]
    %v337 = vld [vmem:[%s2 + $0x70] sm:$0xff]
    %v338 = vld [vmem:[%s2 + $0x78] sm:$0xff]
    %339 = vmatprep.subr.mxu0 0.0
    %340 = vmatpush1.msra.mxu0 %v323
    %341 = vmatprep.subr.mxu0 0.0
    %342 = vmatpush1.msra.mxu0 %v324
    %343 = vmatprep.subr.mxu0 0.0
    %344 = vmatpush1.msra.mxu0 %v325
    %345 = vmatprep.subr.mxu0 0.0
    %346 = vmatpush1.msra.mxu0 %v326
    %347 = vmatprep.subr.mxu0 0.0
    %348 = vmatpush1.msra.mxu0 %v327
    %349 = vmatprep.subr.mxu0 0.0
    %350 = vmatpush1.msra.mxu0 %v328
    %351 = vmatprep.subr.mxu0 0.0
    %352 = vmatpush1.msra.mxu0 %v329
    %353 = vmatprep.subr.mxu0 0.0
    %354 = vmatpush1.msra.mxu0 %v330
    %355 = vmatprep.subr.mxu0 0.0
    %356 = vmatpush1.msra.mxu0 %v331
    %357 = vmatprep.subr.mxu0 0.0
    %358 = vmatpush1.msra.mxu0 %v332
    %359 = vmatprep.subr.mxu0 0.0
    %360 = vmatpush1.msra.mxu0 %v333
    %361 = vmatprep.subr.mxu0 0.0
    %362 = vmatpush1.msra.mxu0 %v334
    %363 = vmatprep.subr.mxu0 0.0
    %364 = vmatpush1.msra.mxu0 %v335
    %365 = vmatprep.subr.mxu0 0.0
    %366 = vmatpush1.msra.mxu0 %v336
    %367 = vmatprep.subr.mxu0 0.0
    %368 = vmatpush1.msra.mxu0 %v337
    %369 = vmatprep.subr.mxu0 0.0
    %370 = vmatpush1.msra.mxu0 %v338
    %371 = vmatprep.subr.mxu0 0.0
    %372 = vmatpush1.msra.mxu0 0.0
    %373 = vmatprep.subr.mxu0 0.0
    %374 = vmatpush1.msra.mxu0 0.0
    %375 = vmatprep.subr.mxu0 0.0
    %376 = vmatpush1.msra.mxu0 0.0
    %377 = vmatprep.subr.mxu0 0.0
    %378 = vmatpush1.msra.mxu0 0.0
    %379 = vmatprep.subr.mxu0 0.0
    %380 = vmatpush1.msra.mxu0 0.0
    %381 = vmatprep.subr.mxu0 0.0
    %382 = vmatpush1.msra.mxu0 0.0
    %383 = vmatprep.subr.mxu0 0.0
    %384 = vmatpush1.msra.mxu0 0.0
    %385 = vmatprep.subr.mxu0 0.0
    %386 = vmatpush1.msra.mxu0 0.0
    %387 = vmatprep.subr.mxu0 0.0
    %388 = vmatpush1.msra.mxu0 0.0
    %389 = vmatprep.subr.mxu0 0.0
    %390 = vmatpush1.msra.mxu0 0.0
    %391 = vmatprep.subr.mxu0 0.0
    %392 = vmatpush1.msra.mxu0 0.0
    %393 = vmatprep.subr.mxu0 0.0
    %394 = vmatpush1.msra.mxu0 0.0
    %395 = vmatprep.subr.mxu0 0.0
    %396 = vmatpush1.msra.mxu0 0.0
    %397 = vmatprep.subr.mxu0 0.0
    %398 = vmatpush1.msra.mxu0 0.0
    %399 = vmatprep.subr.mxu0 0.0
    %400 = vmatpush1.msra.mxu0 0.0
    %401 = vmatprep.subr.mxu0 0.0
    %402 = vmatpush1.msra.mxu0 0.0
    %403 = vmatprep.mubr.f32.mxu0 0.0
    %404 = vmatmul.mubr.f32.gmra.mrb[0].mxu0 %v181
    %v405 = vpop.f32.mrb[0].mxu0
    %v406 = vadd.f32 0.0, %v405
    %v407 = vpop.f32.mrb[0].mxu0
    %408 = vmatprep.mubr.f32.mxu0 0.0
    %409 = vmatmul.mubr.f32.gmra.mrb[0].mxu0 %v184
    %v410 = vpop.f32.mrb[0].mxu0
    %v411 = vadd.f32 0.0, %v410
    %v412 = vpop.f32.mrb[0].mxu0
    %413 = vmatprep.mubr.f32.mxu0 0.0
    %414 = vmatmul.mubr.f32.gmra.mrb[0].mxu0 %v189
    %v415 = vpop.f32.mrb[0].mxu0
    %v416 = vadd.f32 0.0, %v415
    %v417 = vpop.f32.mrb[0].mxu0
    %418 = vmatprep.mubr.f32.mxu0 0.0
    %419 = vmatmul.mubr.f32.gmra.mrb[0].mxu0 %v192
    %v420 = vpop.f32.mrb[0].mxu0
    %v421 = vadd.f32 0.0, %v420
    %v422 = vpop.f32.mrb[0].mxu0
    %423 = vmatprep.mubr.f32.mxu0 0.0
    %424 = vmatmul.mubr.f32.gmra.mrb[0].mxu0 %v197
    %v425 = vpop.f32.mrb[0].mxu0
    %v426 = vadd.f32 0.0, %v425
    %v427 = vpop.f32.mrb[0].mxu0
    %428 = vmatprep.mubr.f32.mxu0 0.0
    %429 = vmatmul.mubr.f32.gmra.mrb[0].mxu0 %v200
    %v430 = vpop.f32.mrb[0].mxu0
    %v431 = vadd.f32 0.0, %v430
    %v432 = vpop.f32.mrb[0].mxu0
    %433 = vmatprep.mubr.f32.mxu0 0.0
    %434 = vmatmul.mubr.f32.gmra.mrb[0].mxu0 %v205
    %v435 = vpop.f32.mrb[0].mxu0
    %v436 = vadd.f32 0.0, %v435
    %v437 = vpop.f32.mrb[0].mxu0
    %438 = vmatprep.mubr.f32.mxu0 0.0
    %439 = vmatmul.mubr.f32.gmra.mrb[0].mxu0 %v208
    %v440 = vpop.f32.mrb[0].mxu0
    %v441 = vadd.f32 0.0, %v440
    %v442 = vpop.f32.mrb[0].mxu0
    %443 = vmatprep.mubr.f32.mxu0 0.0
    %444 = vmatmul.mubr.f32.gmra.mrb[0].mxu0 %v213
    %v445 = vpop.f32.mrb[0].mxu0
    %v446 = vadd.f32 0.0, %v445
    %v447 = vpop.f32.mrb[0].mxu0
    %448 = vmatprep.mubr.f32.mxu0 0.0
    %449 = vmatmul.mubr.f32.gmra.mrb[0].mxu0 %v216
    %v450 = vpop.f32.mrb[0].mxu0
    %v451 = vadd.f32 0.0, %v450
    %v452 = vpop.f32.mrb[0].mxu0
    %453 = vmatprep.mubr.f32.mxu0 0.0
    %454 = vmatmul.mubr.f32.gmra.mrb[0].mxu0 %v221
    %v455 = vpop.f32.mrb[0].mxu0
    %v456 = vadd.f32 0.0, %v455
    %v457 = vpop.f32.mrb[0].mxu0
    %458 = vmatprep.mubr.f32.mxu0 0.0
    %459 = vmatmul.mubr.f32.gmra.mrb[0].mxu0 %v224
    %v460 = vpop.f32.mrb[0].mxu0
    %v461 = vadd.f32 0.0, %v460
    %v462 = vpop.f32.mrb[0].mxu0
    %463 = vmatprep.mubr.f32.mxu0 0.0
    %464 = vmatmul.mubr.f32.gmra.mrb[0].mxu0 %v229
    %v465 = vpop.f32.mrb[0].mxu0
    %v466 = vadd.f32 0.0, %v465
    %v467 = vpop.f32.mrb[0].mxu0
    %468 = vmatprep.mubr.f32.mxu0 0.0
    %469 = vmatmul.mubr.f32.gmra.mrb[0].mxu0 %v232
    %v470 = vpop.f32.mrb[0].mxu0
    %v471 = vadd.f32 0.0, %v470
    %v472 = vpop.f32.mrb[0].mxu0
    %473 = vmatprep.mubr.f32.mxu0 0.0
    %474 = vmatmul.mubr.f32.gmra.mrb[0].mxu0 %v237
    %v475 = vpop.f32.mrb[0].mxu0
    %v476 = vadd.f32 0.0, %v475
    %v477 = vpop.f32.mrb[0].mxu0
    %478 = vmatprep.mubr.f32.mxu0 0.0
    %479 = vmatmul.mubr.f32.gmra.mrb[0].mxu0 %v240
    %v480 = vpop.f32.mrb[0].mxu0
    %v481 = vadd.f32 0.0, %v480
    %v482 = vpop.f32.mrb[0].mxu0
    %483 = vdwg.mxu0
    %vm484 = vcmask 15360
    %485 = vst.msk [vmem:[%s4] sm:$0xff] %vm484, %v406
    %486 = vst.msk [vmem:[%s4 + $0x8] sm:$0xff] %vm484, %v411
    %487 = vst.msk [vmem:[%s4 + $0x10] sm:$0xff] %vm484, %v416
    %488 = vst.msk [vmem:[%s4 + $0x18] sm:$0xff] %vm484, %v421
    %489 = vst.msk [vmem:[%s4 + $0x20] sm:$0xff] %vm484, %v426
    %490 = vst.msk [vmem:[%s4 + $0x28] sm:$0xff] %vm484, %v431
    %491 = vst.msk [vmem:[%s4 + $0x30] sm:$0xff] %vm484, %v436
    %492 = vst.msk [vmem:[%s4 + $0x38] sm:$0xff] %vm484, %v441
    %493 = vst.msk [vmem:[%s4 + $0x40] sm:$0xff] %vm484, %v446
    %494 = vst.msk [vmem:[%s4 + $0x48] sm:$0xff] %vm484, %v451
    %495 = vst.msk [vmem:[%s4 + $0x50] sm:$0xff] %vm484, %v456
    %496 = vst.msk [vmem:[%s4 + $0x58] sm:$0xff] %vm484, %v461
    %497 = vst.msk [vmem:[%s4 + $0x60] sm:$0xff] %vm484, %v466
    %498 = vst.msk [vmem:[%s4 + $0x68] sm:$0xff] %vm484, %v471
    %499 = vst.msk [vmem:[%s4 + $0x70] sm:$0xff] %vm484, %v476
    %500 = vst.msk [vmem:[%s4 + $0x78] sm:$0xff] %vm484, %v481
    // Predicated region
    $region14: #{tpu_custom_call.1} parent=1 // pred_check
      _
    $region15: #{tpu_custom_call.1} parent=1 // pred_check_branch
      %502 = sbr.rel (0) target = $region17
    $region16: #{tpu_custom_call.1} parent=1 // pred_region
      %s504 = ssub.s32 1024, 1024
      %505 = vsyncadd [#allocation3], %s504
      %s506 = sshll.u32 [#allocation2], 4
      %s507 = int_to_ptr.vmem [resolvable:$true] %s506
      %512 = dma.vmem_to_hbm [thread:$0]  %s507, 1024, %s3, [#allocation3], 64, 64, 4
    $region17: #{tpu_custom_call.1} parent=1 // pred_fallthru
      _
    // Predicated region
    $region18: #{tpu_custom_call.1} parent=1 // pred_check
      _
    $region19: #{tpu_custom_call.1} parent=1 // pred_check_branch
      %514 = sbr.rel (0) target = $region21
    $region20: #{tpu_custom_call.1} parent=1 // pred_region
      _
    $region21: #{tpu_custom_call.1} parent=1 // pred_fallthru
      _
    // Predicated region
    $region22: #{tpu_custom_call.1} parent=1 // pred_check
      _
    $region23: #{tpu_custom_call.1} parent=1 // pred_check_branch
      %516 = sbr.rel (0) target = $region25
    $region24: #{tpu_custom_call.1} parent=1 // pred_region
      %517 = dma.done [#allocation3], 1024
    $region25: #{tpu_custom_call.1} parent=1 // pred_fallthru
      _
    // Predicated region
    $region26: #{tpu_custom_call.1} parent=1 // pred_check
      _
    $region27: #{tpu_custom_call.1} parent=1 // pred_check_branch
      %519 = sbr.rel (0) target = $region29
    $region28: #{tpu_custom_call.1} parent=1 // pred_region
      _
    $region29: #{tpu_custom_call.1} parent=1 // pred_fallthru
      _
    %520 = vsyncpa [#allocation3], 1

</llo_original>
